<compile_context>
chip_gen: v5e
topology: v5e:2x2
jax: 0.10.0
libtpu: 0.0.40
codegen_flags: <defaults>
</compile_context>

<pallas_src>
import math

import jax
import jax.numpy as jnp
from jax.experimental import pallas as pl
from jax.experimental.pallas import tpu as pltpu


def mlp_kernel(x_ref, w1_ref, b1_ref, w2_ref, b2_ref, w3_ref, b3_ref,
               w4_ref, b4_ref, o_ref):
    # In-kernel cast to bf16 (no-op if the producer already supplies bf16); avoids a
    # wrapper-side astype that would re-read/re-write all of x in HBM.
    xb = x_ref[...].astype(jnp.bfloat16)

    # fc1: (TILE_B, 363) bf16 @ (363, 128) bf16 -> f32 accumulate on the MXU.
    h = jnp.dot(xb, w1_ref[...], preferred_element_type=jnp.float32)
    h = jnp.maximum(h + b1_ref[...], 0.0)

    # dropout(p=0.5): identity in eval mode.

    # fc2: zero-padded rows of w2 cancel the zero-padded fc1 columns exactly.
    h = jnp.dot(h.astype(jnp.bfloat16), w2_ref[...],
                preferred_element_type=jnp.float32)
    h = jnp.maximum(h + b2_ref[...], 0.0)

    # fc3: 32 -> 16.
    h = jnp.dot(h.astype(jnp.bfloat16), w3_ref[...],
                preferred_element_type=jnp.float32)
    h = jnp.maximum(h + b3_ref[...], 0.0)                       # (TILE_B, 16) f32

    # Output head 16 -> 1 for the whole tile in one MXU pass, laid out along lanes:
    # (8, 16) @ (TILE_B, 16)^T -> (8, TILE_B); all rows identical, keep row 0.
    # This makes the HBM store lane-dense and keeps the sigmoid tail on dense vregs.
    nt_dims = (((1,), (1,)), ((), ()))        # contract the hidden dim of both sides
    logits = jax.lax.dot_general(w4_ref[...], h, nt_dims,
                                 preferred_element_type=jnp.float32)[0:1, :]
    logits = logits + b4_ref[0, 0]            # scalar bias from SMEM

    # Numerically stable sigmoid (avoids the inf intermediate of 1/(1+exp(-x))).
    z = jnp.exp(-jnp.abs(logits))
    sig = jnp.where(logits >= 0.0, 1.0 / (1.0 + z), z / (1.0 + z))
    o_ref[...] = sig[None]                    # (1, 1, TILE_B): lane-dense store


def net_forward(x, packed_params, tile_b=2048):
    """Fused forward pass. x: (B, 363) float32/bfloat16 -> (B, 1) float32 sigmoid."""
    w1, b1, w2, b2, w3, b3, w4, b4 = packed_params
    B, F = x.shape

    # Batch tile: as large as tile_b (amortizes per-grid-step overhead; pipeline stays
    # DMA-bound), always a multiple of 128 for the lane-dense output head.  No
    # wrapper-side pad: Pallas masks the partial last block, padded rows are sliced off.
    tb = min(tile_b, ((B + 127) // 128) * 128)
    tb = max(128, (tb // 128) * 128)
    nb = pl.cdiv(B, tb)

    # Weights/biases: constant block index => fetched once, VMEM-resident for all steps.
    def resident(arr):
        shp = arr.shape
        return pl.BlockSpec(shp, lambda i: (0,) * len(shp))

    out = pl.pallas_call(
        mlp_kernel,
        out_shape=jax.ShapeDtypeStruct((nb, 1, tb), jnp.float32),
        grid=(nb,),
        in_specs=[
            pl.BlockSpec((tb, F), lambda i: (i, 0)),     # streamed x tile (pipelined)
            resident(w1), resident(b1),
            resident(w2), resident(b2),
            resident(w3), resident(b3),
            resident(w4),
            pl.BlockSpec(memory_space=pltpu.MemorySpace.SMEM),   # b4: scalar in SMEM
        ],
        out_specs=pl.BlockSpec((1, 1, tb), lambda i: (i, 0, 0)),
        compiler_params=pltpu.CompilerParams(
            dimension_semantics=("parallel",)),          # megacore split on v7x (nb >= 2)
    )(x, w1, b1, w2, b2, w3, b3, w4, b4)

    # (nb, 1, tb) is row-major over batch rows; free metadata reshape + small slice.
    return out.reshape(nb * tb, 1)[:B]


def init_linear(key, fan_in, fan_out):
    """PyTorch nn.Linear-style uniform(-1/sqrt(fan_in), 1/sqrt(fan_in)) init.

    Weight stored as (fan_in, fan_out) = W^T so the kernel computes y = x @ W + b.
    """
    kw, kb = jax.random.split(key)
    bound = 1.0 / math.sqrt(fan_in)
    w = jax.random.uniform(kw, (fan_in, fan_out), jnp.float32, -bound, bound)
    b = jax.random.uniform(kb, (1, fan_out), jnp.float32, -bound, bound)
    return w, b


def pack_params(params):
    """One-time host-side repack of the logical params into the kernel layout."""
    (w1, b1), (w2, b2), (w3, b3), (w4, b4) = params
    # fc1: pad outputs 64 -> 128 lanes (full MXU/lane width); bf16 operands.
    w1p = jnp.pad(w1, ((0, 0), (0, 128 - w1.shape[1]))).astype(jnp.bfloat16)
    b1p = jnp.pad(b1, ((0, 0), (0, 128 - b1.shape[1])))           # f32, zero pad
    # fc2: zero-padded rows cancel the fc1 padding exactly (relu(0 + 0) = 0); bf16.
    w2p = jnp.pad(w2, ((0, 128 - w2.shape[0]), (0, 0))).astype(jnp.bfloat16)
    # fc3: bf16 operands (f32 accumulation in the kernel).
    w3p = w3.astype(jnp.bfloat16)
    # Output head: W^T replicated to 8 sublanes (full sublane tile for the NT matmul);
    # rows are identical, the kernel keeps row 0.  Kept in f32 (tiny).
    w4p = jnp.tile(w4.T, (8, 1))                                  # (8, 16) f32
    b4p = b4.reshape(1, 1)                                        # scalar -> SMEM
    return (w1p, b1p, w2p, b2, w3p, b3, w4p, b4p)


if __name__ == "__main__":
    input_size = 363
    batch = 256          # small test batch; one exact 256-row tile

    key = jax.random.PRNGKey(0)
    k_x, k1, k2, k3, k4 = jax.random.split(key, 5)

    logical_params = (
        init_linear(k1, input_size, 64),   # fc1 (the 64-wide fc1 overrides the 128-wide one, as in __init__)
        init_linear(k2, 64, 32),           # fc2
        init_linear(k3, 32, 16),           # fc3
        init_linear(k4, 16, 1),            # output
    )
    packed = pack_params(logical_params)

    x = jax.random.normal(k_x, (batch, input_size), jnp.float32)

    out = jax.block_until_ready(net_forward(x, packed))

    # Reference in plain JAX (eval-mode dropout = identity) with the same precision
    # recipe as the kernel: bf16 matmul operands, f32 accumulation, f32 head.
    (w1, b1), (w2, b2), (w3, b3), (w4, b4) = logical_params
    bf = jnp.bfloat16
    h = jnp.maximum(jnp.dot(x.astype(bf), w1.astype(bf),
                            preferred_element_type=jnp.float32) + b1, 0.0)
    h = jnp.maximum(jnp.dot(h.astype(bf), w2.astype(bf),
                            preferred_element_type=jnp.float32) + b2, 0.0)
    h = jnp.maximum(jnp.dot(h.astype(bf), w3.astype(bf),
                            preferred_element_type=jnp.float32) + b3, 0.0)
    ref = jax.nn.sigmoid(h @ w4 + b4)

    assert out.shape == (batch, 1)
    max_err = float(jnp.max(jnp.abs(out - ref)))
    assert jnp.allclose(out, ref, atol=2e-3, rtol=2e-3), f"max abs err {max_err}"
    print("KERNEL_OK")
</pallas_src>

<mosaic_0001>
module attributes {stable_mosaic.version = 11 : i64} {
  func.func @mlp_kernel(%arg0: i32, %arg1: memref<256x363xf32, #tpu.memory_space<vmem>>, %arg2: memref<363x128xbf16, #tpu.memory_space<vmem>>, %arg3: memref<1x128xf32, #tpu.memory_space<vmem>>, %arg4: memref<128x32xbf16, #tpu.memory_space<vmem>>, %arg5: memref<1x32xf32, #tpu.memory_space<vmem>>, %arg6: memref<32x16xbf16, #tpu.memory_space<vmem>>, %arg7: memref<1x16xf32, #tpu.memory_space<vmem>>, %arg8: memref<8x16xf32, #tpu.memory_space<vmem>>, %arg9: memref<1x1xf32, #tpu.memory_space<smem>>, %arg10: memref<1x1x256xf32, #tpu.memory_space<vmem>>) attributes {dimension_semantics = [#tpu.dimension_semantics<parallel>], iteration_bounds = array<i64: 1>, scalar_prefetch = 0 : i64, scratch_operands = 0 : i64, tpu.core_type = #tpu.core_type<tc>, window_params = [{transform_indices = @transform_0, window_bounds = array<i64: 256, 363>}, {pipeline_mode = #tpu.pipeline_mode<synchronous>, transform_indices = @transform_1, window_bounds = array<i64: 363, 128>}, {pipeline_mode = #tpu.pipeline_mode<synchronous>, transform_indices = @transform_2, window_bounds = array<i64: 1, 128>}, {pipeline_mode = #tpu.pipeline_mode<synchronous>, transform_indices = @transform_3, window_bounds = array<i64: 128, 32>}, {pipeline_mode = #tpu.pipeline_mode<synchronous>, transform_indices = @transform_4, window_bounds = array<i64: 1, 32>}, {pipeline_mode = #tpu.pipeline_mode<synchronous>, transform_indices = @transform_5, window_bounds = array<i64: 32, 16>}, {pipeline_mode = #tpu.pipeline_mode<synchronous>, transform_indices = @transform_6, window_bounds = array<i64: 1, 16>}, {pipeline_mode = #tpu.pipeline_mode<synchronous>, transform_indices = @transform_7, window_bounds = array<i64: 8, 16>}, {transform_indices = @transform_8, window_bounds = array<i64: 1, 1>}, {transform_indices = @transform_9, window_bounds = array<i64: 1, 1, 256>}]} {
    %c0 = arith.constant 0 : index
    %c0_0 = arith.constant 0 : index
    %0 = vector.load %arg1[%c0, %c0_0] : memref<256x363xf32, #tpu.memory_space<vmem>>, vector<256x363xf32>
    %1 = arith.truncf %0 : vector<256x363xf32> to vector<256x363xbf16>
    %c0_1 = arith.constant 0 : index
    %c0_2 = arith.constant 0 : index
    %2 = vector.load %arg2[%c0_1, %c0_2] : memref<363x128xbf16, #tpu.memory_space<vmem>>, vector<363x128xbf16>
    %cst = arith.constant dense<0.000000e+00> : vector<256x128xf32>
    %3 = tpu.matmul %1, %2, %cst {dimension_numbers = #tpu.dot_dimension_numbers<[1], [0], [0], [1], [0, 0, 1, 1], [], []>} : vector<256x363xbf16>, vector<363x128xbf16>, vector<256x128xf32> -> vector<256x128xf32>
    %c0_3 = arith.constant 0 : index
    %c0_4 = arith.constant 0 : index
    %4 = vector.load %arg3[%c0_3, %c0_4] : memref<1x128xf32, #tpu.memory_space<vmem>>, vector<1x128xf32>
    %5 = vector.broadcast %4 : vector<1x128xf32> to vector<256x128xf32>
    %6 = arith.addf %3, %5 : vector<256x128xf32>
    %cst_5 = arith.constant 0.000000e+00 : f32
    %7 = vector.broadcast %cst_5 : f32 to vector<256x128xf32>
    %8 = arith.maximumf %6, %7 : vector<256x128xf32>
    %9 = arith.truncf %8 : vector<256x128xf32> to vector<256x128xbf16>
    %c0_6 = arith.constant 0 : index
    %c0_7 = arith.constant 0 : index
    %10 = vector.load %arg4[%c0_6, %c0_7] : memref<128x32xbf16, #tpu.memory_space<vmem>>, vector<128x32xbf16>
    %cst_8 = arith.constant dense<0.000000e+00> : vector<256x32xf32>
    %11 = tpu.matmul %9, %10, %cst_8 {dimension_numbers = #tpu.dot_dimension_numbers<[1], [0], [0], [1], [0, 0, 1, 1], [], []>} : vector<256x128xbf16>, vector<128x32xbf16>, vector<256x32xf32> -> vector<256x32xf32>
    %c0_9 = arith.constant 0 : index
    %c0_10 = arith.constant 0 : index
    %12 = vector.load %arg5[%c0_9, %c0_10] : memref<1x32xf32, #tpu.memory_space<vmem>>, vector<1x32xf32>
    %13 = vector.broadcast %12 : vector<1x32xf32> to vector<256x32xf32>
    %14 = arith.addf %11, %13 : vector<256x32xf32>
    %cst_11 = arith.constant 0.000000e+00 : f32
    %15 = vector.broadcast %cst_11 : f32 to vector<256x32xf32>
    %16 = arith.maximumf %14, %15 : vector<256x32xf32>
    %17 = arith.truncf %16 : vector<256x32xf32> to vector<256x32xbf16>
    %c0_12 = arith.constant 0 : index
    %c0_13 = arith.constant 0 : index
    %18 = vector.load %arg6[%c0_12, %c0_13] : memref<32x16xbf16, #tpu.memory_space<vmem>>, vector<32x16xbf16>
    %cst_14 = arith.constant dense<0.000000e+00> : vector<256x16xf32>
    %19 = tpu.matmul %17, %18, %cst_14 {dimension_numbers = #tpu.dot_dimension_numbers<[1], [0], [0], [1], [0, 0, 1, 1], [], []>} : vector<256x32xbf16>, vector<32x16xbf16>, vector<256x16xf32> -> vector<256x16xf32>
    %c0_15 = arith.constant 0 : index
    %c0_16 = arith.constant 0 : index
    %20 = vector.load %arg7[%c0_15, %c0_16] : memref<1x16xf32, #tpu.memory_space<vmem>>, vector<1x16xf32>
    %21 = vector.broadcast %20 : vector<1x16xf32> to vector<256x16xf32>
    %22 = arith.addf %19, %21 : vector<256x16xf32>
    %cst_17 = arith.constant 0.000000e+00 : f32
    %23 = vector.broadcast %cst_17 : f32 to vector<256x16xf32>
    %24 = arith.maximumf %22, %23 : vector<256x16xf32>
    %c0_18 = arith.constant 0 : index
    %c0_19 = arith.constant 0 : index
    %25 = vector.load %arg8[%c0_18, %c0_19] : memref<8x16xf32, #tpu.memory_space<vmem>>, vector<8x16xf32>
    %cst_20 = arith.constant dense<0.000000e+00> : vector<8x256xf32>
    %26 = tpu.matmul %25, %24, %cst_20 {dimension_numbers = #tpu.dot_dimension_numbers<[1], [1], [0], [0], [0, 0, 1, 0], [], []>} : vector<8x16xf32>, vector<256x16xf32>, vector<8x256xf32> -> vector<8x256xf32>
    %27 = vector.extract_strided_slice %26 {offsets = [0, 0], sizes = [1, 256], strides = [1, 1]} : vector<8x256xf32> to vector<1x256xf32>
    %c0_21 = arith.constant 0 : index
    %c0_22 = arith.constant 0 : index
    %28 = memref.load %arg9[%c0_21, %c0_22] : memref<1x1xf32, #tpu.memory_space<smem>>
    %29 = vector.broadcast %28 : f32 to vector<1x256xf32>
    %30 = arith.addf %27, %29 : vector<1x256xf32>
    %31 = math.absf %30 : vector<1x256xf32>
    %cst_23 = arith.constant 0.000000e+00 : f32
    %32 = vector.broadcast %cst_23 : f32 to vector<1x256xf32>
    %33 = arith.subf %32, %31 : vector<1x256xf32>
    %34 = math.exp %33 : vector<1x256xf32>
    %cst_24 = arith.constant 0.000000e+00 : f32
    %35 = vector.broadcast %cst_24 : f32 to vector<1x256xf32>
    %36 = arith.cmpf oge, %30, %35 : vector<1x256xf32>
    %cst_25 = arith.constant 1.000000e+00 : f32
    %37 = vector.broadcast %cst_25 : f32 to vector<1x256xf32>
    %38 = arith.addf %37, %34 : vector<1x256xf32>
    %cst_26 = arith.constant 1.000000e+00 : f32
    %39 = vector.broadcast %cst_26 : f32 to vector<1x256xf32>
    %40 = arith.divf %39, %38 : vector<1x256xf32>
    %cst_27 = arith.constant 1.000000e+00 : f32
    %41 = vector.broadcast %cst_27 : f32 to vector<1x256xf32>
    %42 = arith.addf %41, %34 : vector<1x256xf32>
    %43 = arith.divf %34, %42 : vector<1x256xf32>
    %44 = arith.select %36, %40, %43 : vector<1x256xi1>, vector<1x256xf32>
    %45 = vector.shape_cast %44 : vector<1x256xf32> to vector<1x1x256xf32>
    %c0_28 = arith.constant 0 : index
    %c0_29 = arith.constant 0 : index
    %c0_30 = arith.constant 0 : index
    %46 = vector.load %arg10[%c0_28, %c0_29, %c0_30] : memref<1x1x256xf32, #tpu.memory_space<vmem>>, vector<1x1x256xf32>
    tpu.vector_store %arg10[%c0_28, %c0_29, %c0_30], %45 {strides = array<i32>} : memref<1x1x256xf32, #tpu.memory_space<vmem>>, vector<1x1x256xf32>,
    return
  }
  func.func @transform_0(%arg0: i32) -> (i32, i32) {
    %c0_i32 = arith.constant 0 : i32
    %c0_i32_0 = arith.constant 0 : i32
    return %arg0, %c0_i32 : i32, i32
  }
  func.func @transform_1(%arg0: i32) -> (i32, i32) {
    %c0_i32 = arith.constant 0 : i32
    %c0_i32_0 = arith.constant 0 : i32
    %c0_i32_1 = arith.constant 0 : i32
    return %c0_i32, %c0_i32_0 : i32, i32
  }
  func.func @transform_2(%arg0: i32) -> (i32, i32) {
    %c0_i32 = arith.constant 0 : i32
    %c0_i32_0 = arith.constant 0 : i32
    %c0_i32_1 = arith.constant 0 : i32
    return %c0_i32, %c0_i32_0 : i32, i32
  }
  func.func @transform_3(%arg0: i32) -> (i32, i32) {
    %c0_i32 = arith.constant 0 : i32
    %c0_i32_0 = arith.constant 0 : i32
    %c0_i32_1 = arith.constant 0 : i32
    return %c0_i32, %c0_i32_0 : i32, i32
  }
  func.func @transform_4(%arg0: i32) -> (i32, i32) {
    %c0_i32 = arith.constant 0 : i32
    %c0_i32_0 = arith.constant 0 : i32
    %c0_i32_1 = arith.constant 0 : i32
    return %c0_i32, %c0_i32_0 : i32, i32
  }
  func.func @transform_5(%arg0: i32) -> (i32, i32) {
    %c0_i32 = arith.constant 0 : i32
    %c0_i32_0 = arith.constant 0 : i32
    %c0_i32_1 = arith.constant 0 : i32
    return %c0_i32, %c0_i32_0 : i32, i32
  }
  func.func @transform_6(%arg0: i32) -> (i32, i32) {
    %c0_i32 = arith.constant 0 : i32
    %c0_i32_0 = arith.constant 0 : i32
    %c0_i32_1 = arith.constant 0 : i32
    return %c0_i32, %c0_i32_0 : i32, i32
  }
  func.func @transform_7(%arg0: i32) -> (i32, i32) {
    %c0_i32 = arith.constant 0 : i32
    %c0_i32_0 = arith.constant 0 : i32
    %c0_i32_1 = arith.constant 0 : i32
    return %c0_i32, %c0_i32_0 : i32, i32
  }
  func.func @transform_8(%arg0: i32) -> (i32, i32) {
    %c0_i32 = arith.constant 0 : i32
    %c0_i32_0 = arith.constant 0 : i32
    %c0_i32_1 = arith.constant 0 : i32
    return %c0_i32, %c0_i32_0 : i32, i32
  }
  func.func @transform_9(%arg0: i32) -> (i32, i32, i32) {
    %c0_i32 = arith.constant 0 : i32
    %c0_i32_0 = arith.constant 0 : i32
    %c0_i32_1 = arith.constant 0 : i32
    return %arg0, %c0_i32, %c0_i32_0 : i32, i32, i32
  }
}

</mosaic_0001>

<llo_original>
// kernel: tpu_custom_call.1
$region0: #{tpu_custom_call.1}
  #allocation0 [shape = 'u32[]', space=smem, size = 0x4, offset = 0x4, fixed_abs, tag = 'smem constant byte address 0x4 - core index']
  #allocation1 [shape = 'u32[72,128]{1,0:T(1,128)}', space=vmem, size = 0x9000, scoped, tag = 'internal scratch']
  #allocation2 [shape = 'f32[1,1]{1,0:T(1,128)S(6)}', space=smem, size = 0x200, scoped, tag = 'scoped memory for tpu_custom_call.1']
  %s0 = inlined_call_operand.vmem [shape: f32[256,363], index: 0, kind: input, shape index: {}]
  %s1 = inlined_call_operand.vmem [shape: bf16[363,128], index: 1, kind: input, shape index: {}]
  %s2 = inlined_call_operand.vmem [shape: f32[1,128], index: 2, kind: input, shape index: {}]
  %s3 = inlined_call_operand.vmem [shape: bf16[128,32], index: 3, kind: input, shape index: {}]
  %s4 = inlined_call_operand.vmem [shape: f32[1,32], index: 4, kind: input, shape index: {}]
  %s5 = inlined_call_operand.vmem [shape: bf16[32,16], index: 5, kind: input, shape index: {}]
  %s6 = inlined_call_operand.vmem [shape: f32[1,16], index: 6, kind: input, shape index: {}]
  %s7 = inlined_call_operand.vmem [shape: f32[8,16], index: 7, kind: input, shape index: {}]
  %s8 = inlined_call_operand.<no memory space> [shape: f32[1,1], index: 8, kind: input, shape index: {}]
  %s9 = inlined_call_operand.hbm [shape: f32[1,1,256], index: 9, kind: output, shape index: {}]
  %s10 = sld [smem:[#allocation0]]
  $region46: #{tpu_custom_call.1} parent=0
    _
  %s12 = ssub.s32 1, %s10
  %s13 = scalar_select 0, %s12, %s10
  %14 = sst [smem:[#allocation2]] %s8
  $region1: #{tpu_custom_call.1} parent=0
    #allocation3 [shape = 'u8[1024]{0}', space=vmem, size = 0x400, scoped, tag = 'output window, operand 0, single buffered']
    #allocation4 [shape = 's32[1]{0}', space=sflag, size = 0x4, scoped, tag = 'scoped memory for tpu_custom_call.1']
    %15 = vsyncpa [#allocation4], 0
    // Predicated region
    $region2: #{tpu_custom_call.1} parent=1 // pred_check
      _
    $region3: #{tpu_custom_call.1} parent=1 // pred_check_branch
      %17 = sbr.rel (0) target = $region5
    $region4: #{tpu_custom_call.1} parent=1 // pred_region
      _
    $region5: #{tpu_custom_call.1} parent=1 // pred_fallthru
      _
    // Predicated region
    $region6: #{tpu_custom_call.1} parent=1 // pred_check
      _
    $region7: #{tpu_custom_call.1} parent=1 // pred_check_branch
      %19 = sbr.rel (0) target = $region9
    $region8: #{tpu_custom_call.1} parent=1 // pred_region
      _
    $region9: #{tpu_custom_call.1} parent=1 // pred_fallthru
      _
    // Predicated region
    $region10: #{tpu_custom_call.1} parent=1 // pred_check
      _
    $region11: #{tpu_custom_call.1} parent=1 // pred_check_branch
      %21 = sbr.rel (0) target = $region13
    $region12: #{tpu_custom_call.1} parent=1 // pred_region
      _
    $region13: #{tpu_custom_call.1} parent=1 // pred_fallthru
      _
    // Predicated region
    $region14: #{tpu_custom_call.1} parent=1 // pred_check
      _
    $region15: #{tpu_custom_call.1} parent=1 // pred_check_branch
      %23 = sbr.rel (0) target = $region17
    $region16: #{tpu_custom_call.1} parent=1 // pred_region
      _
    $region17: #{tpu_custom_call.1} parent=1 // pred_fallthru
      _
    // Predicated region
    $region18: #{tpu_custom_call.1} parent=1 // pred_check
      _
    $region19: #{tpu_custom_call.1} parent=1 // pred_check_branch
      %25 = sbr.rel (0) target = $region21
    $region20: #{tpu_custom_call.1} parent=1 // pred_region
      _
    $region21: #{tpu_custom_call.1} parent=1 // pred_fallthru
      _
    // Predicated region
    $region22: #{tpu_custom_call.1} parent=1 // pred_check
      _
    $region23: #{tpu_custom_call.1} parent=1 // pred_check_branch
      %27 = sbr.rel (0) target = $region25
    $region24: #{tpu_custom_call.1} parent=1 // pred_region
      _
    $region25: #{tpu_custom_call.1} parent=1 // pred_fallthru
      _
    // Predicated region
    $region26: #{tpu_custom_call.1} parent=1 // pred_check
      _
    $region27: #{tpu_custom_call.1} parent=1 // pred_check_branch
      %29 = sbr.rel (0) target = $region29
    $region28: #{tpu_custom_call.1} parent=1 // pred_region
      _
    $region29: #{tpu_custom_call.1} parent=1 // pred_fallthru
      _
    // Predicated region
    $region30: #{tpu_custom_call.1} parent=1 // pred_check
      _
    $region31: #{tpu_custom_call.1} parent=1 // pred_check_branch
      %31 = sbr.rel (0) target = $region33
    $region32: #{tpu_custom_call.1} parent=1 // pred_region
      _
    $region33: #{tpu_custom_call.1} parent=1 // pred_fallthru
      _
    // Predicated region
    $region34: #{tpu_custom_call.1} parent=1 // pred_check
      _
    $region35: #{tpu_custom_call.1} parent=1 // pred_check_branch
      %33 = sbr.rel (0) target = $region37
    $region36: #{tpu_custom_call.1} parent=1 // pred_region
      _
    $region37: #{tpu_custom_call.1} parent=1 // pred_fallthru
      _
    %v35 = vld [vmem:[%s0] sm:$0xff]
    %v36 = vld [vmem:[%s0 + $0x8] sm:$0xff]
    %v37 = vld [vmem:[%s0 + $0x10] sm:$0xff]
    %v38 = vld [vmem:[%s0 + $0x18] sm:$0xff]
    %v39 = vld [vmem:[%s0 + $0x20] sm:$0xff]
    %v40 = vld [vmem:[%s0 + $0x28] sm:$0xff]
    %v41 = vld [vmem:[%s0 + $0x30] sm:$0xff]
    %v42 = vld [vmem:[%s0 + $0x38] sm:$0xff]
    %v43 = vld [vmem:[%s0 + $0x40] sm:$0xff]
    %v44 = vld [vmem:[%s0 + $0x48] sm:$0xff]
    %v45 = vld [vmem:[%s0 + $0x50] sm:$0xff]
    %v46 = vld [vmem:[%s0 + $0x58] sm:$0xff]
    %v47 = vld [vmem:[%s0 + $0x60] sm:$0xff]
    %v48 = vld [vmem:[%s0 + $0x68] sm:$0xff]
    %v49 = vld [vmem:[%s0 + $0x70] sm:$0xff]
    %v50 = vld [vmem:[%s0 + $0x78] sm:$0xff]
    %v51 = vld [vmem:[%s0 + $0x80] sm:$0xff]
    %v52 = vld [vmem:[%s0 + $0x88] sm:$0xff]
    %v53 = vld [vmem:[%s0 + $0x90] sm:$0xff]
    %v54 = vld [vmem:[%s0 + $0x98] sm:$0xff]
    %v55 = vld [vmem:[%s0 + $0xa0] sm:$0xff]
    %v56 = vld [vmem:[%s0 + $0xa8] sm:$0xff]
    %v57 = vld [vmem:[%s0 + $0xb0] sm:$0xff]
    %v58 = vld [vmem:[%s0 + $0xb8] sm:$0xff]
    %v59 = vld [vmem:[%s0 + $0xc0] sm:$0xff]
    %v60 = vld [vmem:[%s0 + $0xc8] sm:$0xff]
    %v61 = vld [vmem:[%s0 + $0xd0] sm:$0xff]
    %v62 = vld [vmem:[%s0 + $0xd8] sm:$0xff]
    %v63 = vld [vmem:[%s0 + $0xe0] sm:$0xff]
    %v64 = vld [vmem:[%s0 + $0xe8] sm:$0xff]
    %v65 = vld [vmem:[%s0 + $0xf0] sm:$0xff]
    %v66 = vld [vmem:[%s0 + $0xf8] sm:$0xff]
    %v67 = vld [vmem:[%s0 + $0x100] sm:$0xff]
    %v68 = vld [vmem:[%s0 + $0x108] sm:$0xff]
    %v69 = vld [vmem:[%s0 + $0x110] sm:$0xff]
    %v70 = vld [vmem:[%s0 + $0x118] sm:$0xff]
    %v71 = vld [vmem:[%s0 + $0x120] sm:$0xff]
    %v72 = vld [vmem:[%s0 + $0x128] sm:$0xff]
    %v73 = vld [vmem:[%s0 + $0x130] sm:$0xff]
    %v74 = vld [vmem:[%s0 + $0x138] sm:$0xff]
    %v75 = vld [vmem:[%s0 + $0x140] sm:$0xff]
    %v76 = vld [vmem:[%s0 + $0x148] sm:$0xff]
    %v77 = vld [vmem:[%s0 + $0x150] sm:$0xff]
    %v78 = vld [vmem:[%s0 + $0x158] sm:$0xff]
    %v79 = vld [vmem:[%s0 + $0x160] sm:$0xff]
    %v80 = vld [vmem:[%s0 + $0x168] sm:$0xff]
    %v81 = vld [vmem:[%s0 + $0x170] sm:$0xff]
    %v82 = vld [vmem:[%s0 + $0x178] sm:$0xff]
    %v83 = vld [vmem:[%s0 + $0x180] sm:$0xff]
    %v84 = vld [vmem:[%s0 + $0x188] sm:$0xff]
    %v85 = vld [vmem:[%s0 + $0x190] sm:$0xff]
    %v86 = vld [vmem:[%s0 + $0x198] sm:$0xff]
    %v87 = vld [vmem:[%s0 + $0x1a0] sm:$0xff]
    %v88 = vld [vmem:[%s0 + $0x1a8] sm:$0xff]
    %v89 = vld [vmem:[%s0 + $0x1b0] sm:$0xff]
    %v90 = vld [vmem:[%s0 + $0x1b8] sm:$0xff]
    %v91 = vld [vmem:[%s0 + $0x1c0] sm:$0xff]
    %v92 = vld [vmem:[%s0 + $0x1c8] sm:$0xff]
    %v93 = vld [vmem:[%s0 + $0x1d0] sm:$0xff]
    %v94 = vld [vmem:[%s0 + $0x1d8] sm:$0xff]
    %v95 = vld [vmem:[%s0 + $0x1e0] sm:$0xff]
    %v96 = vld [vmem:[%s0 + $0x1e8] sm:$0xff]
    %v97 = vld [vmem:[%s0 + $0x1f0] sm:$0xff]
    %v98 = vld [vmem:[%s0 + $0x1f8] sm:$0xff]
    %v99 = vld [vmem:[%s0 + $0x200] sm:$0xff]
    %v100 = vld [vmem:[%s0 + $0x208] sm:$0xff]
    %v101 = vld [vmem:[%s0 + $0x210] sm:$0xff]
    %v102 = vld [vmem:[%s0 + $0x218] sm:$0xff]
    %v103 = vld [vmem:[%s0 + $0x220] sm:$0xff]
    %v104 = vld [vmem:[%s0 + $0x228] sm:$0xff]
    %v105 = vld [vmem:[%s0 + $0x230] sm:$0xff]
    %v106 = vld [vmem:[%s0 + $0x238] sm:$0xff]
    %v107 = vld [vmem:[%s0 + $0x240] sm:$0xff]
    %v108 = vld [vmem:[%s0 + $0x248] sm:$0xff]
    %v109 = vld [vmem:[%s0 + $0x250] sm:$0xff]
    %v110 = vld [vmem:[%s0 + $0x258] sm:$0xff]
    %v111 = vld [vmem:[%s0 + $0x260] sm:$0xff]
    %v112 = vld [vmem:[%s0 + $0x268] sm:$0xff]
    %v113 = vld [vmem:[%s0 + $0x270] sm:$0xff]
    %v114 = vld [vmem:[%s0 + $0x278] sm:$0xff]
    %v115 = vld [vmem:[%s0 + $0x280] sm:$0xff]
    %v116 = vld [vmem:[%s0 + $0x288] sm:$0xff]
    %v117 = vld [vmem:[%s0 + $0x290] sm:$0xff]
    %v118 = vld [vmem:[%s0 + $0x298] sm:$0xff]
    %v119 = vld [vmem:[%s0 + $0x2a0] sm:$0xff]
    %v120 = vld [vmem:[%s0 + $0x2a8] sm:$0xff]
    %v121 = vld [vmem:[%s0 + $0x2b0] sm:$0xff]
    %v122 = vld [vmem:[%s0 + $0x2b8] sm:$0xff]
    %v123 = vld [vmem:[%s0 + $0x2c0] sm:$0xff]
    %v124 = vld [vmem:[%s0 + $0x2c8] sm:$0xff]
    %v125 = vld [vmem:[%s0 + $0x2d0] sm:$0xff]
    %v126 = vld [vmem:[%s0 + $0x2d8] sm:$0xff]
    %v127 = vld [vmem:[%s0 + $0x2e0] sm:$0xff]
    %v128 = vld [vmem:[%s0 + $0x2e8] sm:$0xff]
    %v129 = vld [vmem:[%s0 + $0x2f0] sm:$0xff]
    %v130 = vld [vmem:[%s0 + $0x2f8] sm:$0xff]
    %v131 = vpack.c.bf16 %v38, %v35
    %v132 = vpack.c.bf16 %v39, %v36
    %v133 = vpack.c.bf16 %v40, %v37
    %v134 = vpack.c.bf16 %v44, %v41
    %v135 = vpack.c.bf16 %v45, %v42
    %v136 = vpack.c.bf16 %v46, %v43
    %v137 = vpack.c.bf16 %v50, %v47
    %v138 = vpack.c.bf16 %v51, %v48
    %v139 = vpack.c.bf16 %v52, %v49
    %v140 = vpack.c.bf16 %v56, %v53
    %v141 = vpack.c.bf16 %v57, %v54
    %v142 = vpack.c.bf16 %v58, %v55
    %v143 = vpack.c.bf16 %v62, %v59
    %v144 = vpack.c.bf16 %v63, %v60
    %v145 = vpack.c.bf16 %v64, %v61
    %v146 = vpack.c.bf16 %v68, %v65
    %v147 = vpack.c.bf16 %v69, %v66
    %v148 = vpack.c.bf16 %v70, %v67
    %v149 = vpack.c.bf16 %v74, %v71
    %v150 = vpack.c.bf16 %v75, %v72
    %v151 = vpack.c.bf16 %v76, %v73
    %v152 = vpack.c.bf16 %v80, %v77
    %v153 = vpack.c.bf16 %v81, %v78
    %v154 = vpack.c.bf16 %v82, %v79
    %v155 = vpack.c.bf16 %v86, %v83
    %v156 = vpack.c.bf16 %v87, %v84
    %v157 = vpack.c.bf16 %v88, %v85
    %v158 = vpack.c.bf16 %v92, %v89
    %v159 = vpack.c.bf16 %v93, %v90
    %v160 = vpack.c.bf16 %v94, %v91
    %v161 = vpack.c.bf16 %v98, %v95
    %v162 = vpack.c.bf16 %v99, %v96
    %v163 = vpack.c.bf16 %v100, %v97
    %v164 = vpack.c.bf16 %v104, %v101
    %v165 = vpack.c.bf16 %v105, %v102
    %v166 = vpack.c.bf16 %v106, %v103
    %v167 = vpack.c.bf16 %v110, %v107
    %v168 = vpack.c.bf16 %v111, %v108
    %v169 = vpack.c.bf16 %v112, %v109
    %v170 = vpack.c.bf16 %v116, %v113
    %v171 = vpack.c.bf16 %v117, %v114
    %v172 = vpack.c.bf16 %v118, %v115
    %v173 = vpack.c.bf16 %v122, %v119
    %v174 = vpack.c.bf16 %v123, %v120
    %v175 = vpack.c.bf16 %v124, %v121
    %v176 = vpack.c.bf16 %v128, %v125
    %v177 = vpack.c.bf16 %v129, %v126
    %v178 = vpack.c.bf16 %v130, %v127
    %v179 = vld [vmem:[%s1] sm:$0xf]
    %v180 = vld [vmem:[%s1 + $0x4] sm:$0xf]
    %v181 = vld [vmem:[%s1 + $0x8] sm:$0xf]
    %v182 = vld [vmem:[%s1 + $0xc] sm:$0xf]
    %v183 = vld [vmem:[%s1 + $0x10] sm:$0xf]
    %v184 = vld [vmem:[%s1 + $0x14] sm:$0xf]
    %v185 = vld [vmem:[%s1 + $0x18] sm:$0xf]
    %v186 = vld [vmem:[%s1 + $0x1c] sm:$0xf]
    %v187 = vld [vmem:[%s1 + $0x20] sm:$0xf]
    %v188 = vld [vmem:[%s1 + $0x24] sm:$0xf]
    %v189 = vld [vmem:[%s1 + $0x28] sm:$0xf]
    %v190 = vld [vmem:[%s1 + $0x2c] sm:$0xf]
    %v191 = vld [vmem:[%s1 + $0x30] sm:$0xf]
    %v192 = vld [vmem:[%s1 + $0x34] sm:$0xf]
    %v193 = vld [vmem:[%s1 + $0x38] sm:$0xf]
    %v194 = vld [vmem:[%s1 + $0x3c] sm:$0xf]
    %v195 = vld [vmem:[%s1 + $0x40] sm:$0xf]
    %v196 = vld [vmem:[%s1 + $0x44] sm:$0xf]
    %v197 = vld [vmem:[%s1 + $0x48] sm:$0xf]
    %v198 = vld [vmem:[%s1 + $0x4c] sm:$0xf]
    %v199 = vld [vmem:[%s1 + $0x50] sm:$0xf]
    %v200 = vld [vmem:[%s1 + $0x54] sm:$0xf]
    %v201 = vld [vmem:[%s1 + $0x58] sm:$0xf]
    %v202 = vld [vmem:[%s1 + $0x5c] sm:$0xf]
    %v203 = vld [vmem:[%s1 + $0x60] sm:$0xf]
    %v204 = vld [vmem:[%s1 + $0x64] sm:$0xf]
    %v205 = vld [vmem:[%s1 + $0x68] sm:$0xf]
    %v206 = vld [vmem:[%s1 + $0x6c] sm:$0xf]
    %v207 = vld [vmem:[%s1 + $0x70] sm:$0xf]
    %v208 = vld [vmem:[%s1 + $0x74] sm:$0xf]
    %v209 = vld [vmem:[%s1 + $0x78] sm:$0xf]
    %v210 = vld [vmem:[%s1 + $0x7c] sm:$0xf]
    %v211 = vld [vmem:[%s1 + $0x80] sm:$0xf]
    %v212 = vld [vmem:[%s1 + $0x84] sm:$0xf]
    %v213 = vld [vmem:[%s1 + $0x88] sm:$0xf]
    %v214 = vld [vmem:[%s1 + $0x8c] sm:$0xf]
    %v215 = vld [vmem:[%s1 + $0x90] sm:$0xf]
    %v216 = vld [vmem:[%s1 + $0x94] sm:$0xf]
    %v217 = vld [vmem:[%s1 + $0x98] sm:$0xf]
    %v218 = vld [vmem:[%s1 + $0x9c] sm:$0xf]
    %v219 = vld [vmem:[%s1 + $0xa0] sm:$0xf]
    %v220 = vld [vmem:[%s1 + $0xa4] sm:$0xf]
    %v221 = vld [vmem:[%s1 + $0xa8] sm:$0xf]
    %v222 = vld [vmem:[%s1 + $0xac] sm:$0xf]
    %v223 = vld [vmem:[%s1 + $0xb0] sm:$0xf]
    %v224 = vld [vmem:[%s1 + $0xb4] sm:$0x3]
    %v225 = vld [vmem:[%s2] sm:$0x1]
    %v227 = vperm.slane %v225, 0
    %v275 = vunpack.c.l.b16 %v179
    %v276 = vunpack.c.l.b16 %v180
    %v277 = vunpack.c.l.b16 %v181
    %v278 = vunpack.c.l.b16 %v182
    %v279 = vunpack.c.l.b16 %v183
    %v280 = vunpack.c.l.b16 %v184
    %v281 = vunpack.c.l.b16 %v185
    %v282 = vunpack.c.l.b16 %v186
    %v283 = vunpack.c.l.b16 %v187
    %v284 = vunpack.c.l.b16 %v188
    %v285 = vunpack.c.l.b16 %v189
    %v286 = vunpack.c.l.b16 %v190
    %v287 = vunpack.c.l.b16 %v191
    %v288 = vunpack.c.l.b16 %v192
    %v289 = vunpack.c.l.b16 %v193
    %v290 = vunpack.c.l.b16 %v194
    %v291 = vunpack.c.l.b16 %v195
    %v292 = vunpack.c.l.b16 %v196
    %v293 = vunpack.c.l.b16 %v197
    %v294 = vunpack.c.l.b16 %v198
    %v295 = vunpack.c.l.b16 %v199
    %v296 = vunpack.c.l.b16 %v200
    %v297 = vunpack.c.l.b16 %v201
    %v298 = vunpack.c.l.b16 %v202
    %v299 = vunpack.c.l.b16 %v203
    %v300 = vunpack.c.l.b16 %v204
    %v301 = vunpack.c.l.b16 %v205
    %v302 = vunpack.c.l.b16 %v206
    %v303 = vunpack.c.l.b16 %v207
    %v304 = vunpack.c.l.b16 %v208
    %v305 = vunpack.c.l.b16 %v209
    %v306 = vunpack.c.l.b16 %v210
    %v307 = vunpack.c.l.b16 %v211
    %v308 = vunpack.c.l.b16 %v212
    %v309 = vunpack.c.l.b16 %v213
    %v310 = vunpack.c.l.b16 %v214
    %v311 = vunpack.c.l.b16 %v215
    %v312 = vunpack.c.l.b16 %v216
    %v313 = vunpack.c.l.b16 %v217
    %v314 = vunpack.c.l.b16 %v218
    %v315 = vunpack.c.l.b16 %v219
    %v316 = vunpack.c.l.b16 %v220
    %v317 = vunpack.c.l.b16 %v221
    %v318 = vunpack.c.l.b16 %v222
    %v319 = vunpack.c.l.b16 %v223
    %v320 = vunpack.c.l.b16 %v224
    %v321 = vpack.c.b16 %v276, %v275
    %v322 = vpack.c.b16 %v278, %v277
    %v323 = vpack.c.b16 %v280, %v279
    %v324 = vpack.c.b16 %v282, %v281
    %v325 = vpack.c.b16 %v284, %v283
    %v326 = vpack.c.b16 %v286, %v285
    %v327 = vpack.c.b16 %v288, %v287
    %v328 = vpack.c.b16 %v290, %v289
    %v329 = vpack.c.b16 %v292, %v291
    %v330 = vpack.c.b16 %v294, %v293
    %v331 = vpack.c.b16 %v296, %v295
    %v332 = vpack.c.b16 %v298, %v297
    %v333 = vpack.c.b16 %v300, %v299
    %v334 = vpack.c.b16 %v302, %v301
    %v335 = vpack.c.b16 %v304, %v303
    %v336 = vpack.c.b16 %v306, %v305
    %v337 = vpack.c.b16 %v308, %v307
    %v338 = vpack.c.b16 %v310, %v309
    %v339 = vpack.c.b16 %v312, %v311
    %v340 = vpack.c.b16 %v314, %v313
    %v341 = vpack.c.b16 %v316, %v315
    %v342 = vpack.c.b16 %v318, %v317
    %v343 = vpack.c.b16 %v320, %v319
    %vm366 = vcmask 875520
    %v368 = vsel %vm366, %v133, 0
    %v371 = vsel %vm366, %v136, 0
    %v374 = vsel %vm366, %v139, 0
    %v377 = vsel %vm366, %v142, 0
    %v380 = vsel %vm366, %v145, 0
    %v383 = vsel %vm366, %v148, 0
    %v386 = vsel %vm366, %v151, 0
    %v389 = vsel %vm366, %v154, 0
    %v392 = vsel %vm366, %v157, 0
    %v395 = vsel %vm366, %v160, 0
    %v398 = vsel %vm366, %v163, 0
    %v401 = vsel %vm366, %v166, 0
    %v404 = vsel %vm366, %v169, 0
    %v407 = vsel %vm366, %v172, 0
    %v410 = vsel %vm366, %v175, 0
    %v413 = vsel %vm366, %v178, 0
    %vm415 = vcmask 1044480
    %vm416 = vcmask 1045504
    %v417 = vsel %vm415, 4294967295, 65535
    %v418 = vsel %vm416, %v417, 0
    %v420 = vand.u32 %v343, %v418
    %422 = vmatpush.bf16.msra.mxu0 %v328
    %423 = vmatpush.bf16.msra.mxu0 %v327
    %424 = vmatpush.bf16.msra.mxu0 %v326
    %425 = vmatpush.bf16.msra.mxu0 %v325
    %426 = vmatpush.bf16.msra.mxu0 %v324
    %427 = vmatpush.bf16.msra.mxu0 %v323
    %428 = vmatpush.bf16.msra.mxu0 %v322
    %429 = vmatpush.bf16.msra.mxu0 %v321
    %430 = vmatmul.bf16.gmra.mxu0 %v131
    %v431 = vpop.f32.mrf.mxu0
    %v432 = vadd.f32 %v227, %v431
    %v433 = vpop.f32.mrf.mxu0
    %v434 = vadd.f32 %v227, %v433
    %435 = vmatmul.bf16.gmra.mxu0 %v134
    %v436 = vpop.f32.mrf.mxu0
    %v437 = vadd.f32 %v227, %v436
    %v438 = vpop.f32.mrf.mxu0
    %v439 = vadd.f32 %v227, %v438
    %440 = vmatmul.bf16.gmra.mxu0 %v137
    %v441 = vpop.f32.mrf.mxu0
    %v442 = vadd.f32 %v227, %v441
    %v443 = vpop.f32.mrf.mxu0
    %v444 = vadd.f32 %v227, %v443
    %445 = vmatmul.bf16.gmra.mxu0 %v140
    %v446 = vpop.f32.mrf.mxu0
    %v447 = vadd.f32 %v227, %v446
    %v448 = vpop.f32.mrf.mxu0
    %v449 = vadd.f32 %v227, %v448
    %450 = vmatmul.bf16.gmra.mxu0 %v143
    %v451 = vpop.f32.mrf.mxu0
    %v452 = vadd.f32 %v227, %v451
    %v453 = vpop.f32.mrf.mxu0
    %v454 = vadd.f32 %v227, %v453
    %455 = vmatmul.bf16.gmra.mxu0 %v146
    %v456 = vpop.f32.mrf.mxu0
    %v457 = vadd.f32 %v227, %v456
    %v458 = vpop.f32.mrf.mxu0
    %v459 = vadd.f32 %v227, %v458
    %460 = vmatmul.bf16.gmra.mxu0 %v149
    %v461 = vpop.f32.mrf.mxu0
    %v462 = vadd.f32 %v227, %v461
    %v463 = vpop.f32.mrf.mxu0
    %v464 = vadd.f32 %v227, %v463
    %465 = vmatmul.bf16.gmra.mxu0 %v152
    %v466 = vpop.f32.mrf.mxu0
    %v467 = vadd.f32 %v227, %v466
    %v468 = vpop.f32.mrf.mxu0
    %v469 = vadd.f32 %v227, %v468
    %470 = vmatmul.bf16.gmra.mxu0 %v155
    %v471 = vpop.f32.mrf.mxu0
    %v472 = vadd.f32 %v227, %v471
    %v473 = vpop.f32.mrf.mxu0
    %v474 = vadd.f32 %v227, %v473
    %475 = vmatmul.bf16.gmra.mxu0 %v158
    %v476 = vpop.f32.mrf.mxu0
    %v477 = vadd.f32 %v227, %v476
    %v478 = vpop.f32.mrf.mxu0
    %v479 = vadd.f32 %v227, %v478
    %480 = vmatmul.bf16.gmra.mxu0 %v161
    %v481 = vpop.f32.mrf.mxu0
    %v482 = vadd.f32 %v227, %v481
    %v483 = vpop.f32.mrf.mxu0
    %v484 = vadd.f32 %v227, %v483
    %485 = vmatmul.bf16.gmra.mxu0 %v164
    %v486 = vpop.f32.mrf.mxu0
    %v487 = vadd.f32 %v227, %v486
    %v488 = vpop.f32.mrf.mxu0
    %v489 = vadd.f32 %v227, %v488
    %490 = vmatmul.bf16.gmra.mxu0 %v167
    %v491 = vpop.f32.mrf.mxu0
    %v492 = vadd.f32 %v227, %v491
    %v493 = vpop.f32.mrf.mxu0
    %v494 = vadd.f32 %v227, %v493
    %495 = vmatmul.bf16.gmra.mxu0 %v170
    %v496 = vpop.f32.mrf.mxu0
    %v497 = vadd.f32 %v227, %v496
    %v498 = vpop.f32.mrf.mxu0
    %v499 = vadd.f32 %v227, %v498
    %500 = vmatmul.bf16.gmra.mxu0 %v173
    %v501 = vpop.f32.mrf.mxu0
    %v502 = vadd.f32 %v227, %v501
    %v503 = vpop.f32.mrf.mxu0
    %v504 = vadd.f32 %v227, %v503
    %505 = vmatmul.bf16.gmra.mxu0 %v176
    %v506 = vpop.f32.mrf.mxu0
    %v507 = vadd.f32 %v227, %v506
    %v508 = vpop.f32.mrf.mxu0
    %v509 = vadd.f32 %v227, %v508
    %510 = vdwg.mxu0
    %511 = vmatpush.bf16.msra.mxu0 %v336
    %512 = vmatpush.bf16.msra.mxu0 %v335
    %513 = vmatpush.bf16.msra.mxu0 %v334
    %514 = vmatpush.bf16.msra.mxu0 %v333
    %515 = vmatpush.bf16.msra.mxu0 %v332
    %516 = vmatpush.bf16.msra.mxu0 %v331
    %517 = vmatpush.bf16.msra.mxu0 %v330
    %518 = vmatpush.bf16.msra.mxu0 %v329
    %519 = vmatmul.bf16.gmra.mxu0 %v132
    %v520 = vpop.f32.mrf.mxu0
    %v521 = vadd.f32 %v432, %v520
    %v522 = vpop.f32.mrf.mxu0
    %v523 = vadd.f32 %v434, %v522
    %524 = vmatmul.bf16.gmra.mxu0 %v135
    %v525 = vpop.f32.mrf.mxu0
    %v526 = vadd.f32 %v437, %v525
    %v527 = vpop.f32.mrf.mxu0
    %v528 = vadd.f32 %v439, %v527
    %529 = vmatmul.bf16.gmra.mxu0 %v138
    %v530 = vpop.f32.mrf.mxu0
    %v531 = vadd.f32 %v442, %v530
    %v532 = vpop.f32.mrf.mxu0
    %v533 = vadd.f32 %v444, %v532
    %534 = vmatmul.bf16.gmra.mxu0 %v141
    %v535 = vpop.f32.mrf.mxu0
    %v536 = vadd.f32 %v447, %v535
    %v537 = vpop.f32.mrf.mxu0
    %v538 = vadd.f32 %v449, %v537
    %539 = vmatmul.bf16.gmra.mxu0 %v144
    %v540 = vpop.f32.mrf.mxu0
    %v541 = vadd.f32 %v452, %v540
    %v542 = vpop.f32.mrf.mxu0
    %v543 = vadd.f32 %v454, %v542
    %544 = vmatmul.bf16.gmra.mxu0 %v147
    %v545 = vpop.f32.mrf.mxu0
    %v546 = vadd.f32 %v457, %v545
    %v547 = vpop.f32.mrf.mxu0
    %v548 = vadd.f32 %v459, %v547
    %549 = vmatmul.bf16.gmra.mxu0 %v150
    %v550 = vpop.f32.mrf.mxu0
    %v551 = vadd.f32 %v462, %v550
    %v552 = vpop.f32.mrf.mxu0
    %v553 = vadd.f32 %v464, %v552
    %554 = vmatmul.bf16.gmra.mxu0 %v153
    %v555 = vpop.f32.mrf.mxu0
    %v556 = vadd.f32 %v467, %v555
    %v557 = vpop.f32.mrf.mxu0
    %v558 = vadd.f32 %v469, %v557
    %559 = vmatmul.bf16.gmra.mxu0 %v156
    %v560 = vpop.f32.mrf.mxu0
    %v561 = vadd.f32 %v472, %v560
    %v562 = vpop.f32.mrf.mxu0
    %v563 = vadd.f32 %v474, %v562
    %564 = vmatmul.bf16.gmra.mxu0 %v159
    %v565 = vpop.f32.mrf.mxu0
    %v566 = vadd.f32 %v477, %v565
    %v567 = vpop.f32.mrf.mxu0
    %v568 = vadd.f32 %v479, %v567
    %569 = vmatmul.bf16.gmra.mxu0 %v162
    %v570 = vpop.f32.mrf.mxu0
    %v571 = vadd.f32 %v482, %v570
    %v572 = vpop.f32.mrf.mxu0
    %v573 = vadd.f32 %v484, %v572
    %574 = vmatmul.bf16.gmra.mxu0 %v165
    %v575 = vpop.f32.mrf.mxu0
    %v576 = vadd.f32 %v487, %v575
    %v577 = vpop.f32.mrf.mxu0
    %v578 = vadd.f32 %v489, %v577
    %579 = vmatmul.bf16.gmra.mxu0 %v168
    %v580 = vpop.f32.mrf.mxu0
    %v581 = vadd.f32 %v492, %v580
    %v582 = vpop.f32.mrf.mxu0
    %v583 = vadd.f32 %v494, %v582
    %584 = vmatmul.bf16.gmra.mxu0 %v171
    %v585 = vpop.f32.mrf.mxu0
    %v586 = vadd.f32 %v497, %v585
    %v587 = vpop.f32.mrf.mxu0
    %v588 = vadd.f32 %v499, %v587
    %589 = vmatmul.bf16.gmra.mxu0 %v174
    %v590 = vpop.f32.mrf.mxu0
    %v591 = vadd.f32 %v502, %v590
    %v592 = vpop.f32.mrf.mxu0
    %v593 = vadd.f32 %v504, %v592
    %594 = vmatmul.bf16.gmra.mxu0 %v177
    %v595 = vpop.f32.mrf.mxu0
    %v596 = vadd.f32 %v507, %v595
    %v597 = vpop.f32.mrf.mxu0
    %v598 = vadd.f32 %v509, %v597
    %599 = vdwg.mxu0
    %600 = vmatpush.bf16.msra.mxu0 0
    %601 = vmatpush.bf16.msra.mxu0 %v420
    %602 = vmatpush.bf16.msra.mxu0 %v342
    %603 = vmatpush.bf16.msra.mxu0 %v341
    %604 = vmatpush.bf16.msra.mxu0 %v340
    %605 = vmatpush.bf16.msra.mxu0 %v339
    %606 = vmatpush.bf16.msra.mxu0 %v338
    %607 = vmatpush.bf16.msra.mxu0 %v337
    %608 = vmatmul.bf16.gmra.mxu0 %v368
    %v609 = vpop.f32.mrf.mxu0
    %v610 = vadd.f32 %v521, %v609
    %v611 = vpop.f32.mrf.mxu0
    %v612 = vadd.f32 %v523, %v611
    %613 = vmatmul.bf16.gmra.mxu0 %v371
    %v614 = vpop.f32.mrf.mxu0
    %v615 = vadd.f32 %v526, %v614
    %v616 = vpop.f32.mrf.mxu0
    %v617 = vadd.f32 %v528, %v616
    %618 = vmatmul.bf16.gmra.mxu0 %v374
    %v619 = vpop.f32.mrf.mxu0
    %v620 = vadd.f32 %v531, %v619
    %v621 = vpop.f32.mrf.mxu0
    %v622 = vadd.f32 %v533, %v621
    %623 = vmatmul.bf16.gmra.mxu0 %v377
    %v624 = vpop.f32.mrf.mxu0
    %v625 = vadd.f32 %v536, %v624
    %v626 = vpop.f32.mrf.mxu0
    %v627 = vadd.f32 %v538, %v626
    %628 = vmatmul.bf16.gmra.mxu0 %v380
    %v629 = vpop.f32.mrf.mxu0
    %v630 = vadd.f32 %v541, %v629
    %v631 = vpop.f32.mrf.mxu0
    %v632 = vadd.f32 %v543, %v631
    %633 = vmatmul.bf16.gmra.mxu0 %v383
    %v634 = vpop.f32.mrf.mxu0
    %v635 = vadd.f32 %v546, %v634
    %v636 = vpop.f32.mrf.mxu0
    %v637 = vadd.f32 %v548, %v636
    %638 = vmatmul.bf16.gmra.mxu0 %v386
    %v639 = vpop.f32.mrf.mxu0
    %v640 = vadd.f32 %v551, %v639
    %v641 = vpop.f32.mrf.mxu0
    %v642 = vadd.f32 %v553, %v641
    %643 = vmatmul.bf16.gmra.mxu0 %v389
    %v644 = vpop.f32.mrf.mxu0
    %v645 = vadd.f32 %v556, %v644
    %v646 = vpop.f32.mrf.mxu0
    %v647 = vadd.f32 %v558, %v646
    %648 = vmatmul.bf16.gmra.mxu0 %v392
    %v649 = vpop.f32.mrf.mxu0
    %v650 = vadd.f32 %v561, %v649
    %v651 = vpop.f32.mrf.mxu0
    %v652 = vadd.f32 %v563, %v651
    %653 = vmatmul.bf16.gmra.mxu0 %v395
    %v654 = vpop.f32.mrf.mxu0
    %v655 = vadd.f32 %v566, %v654
    %v656 = vpop.f32.mrf.mxu0
    %v657 = vadd.f32 %v568, %v656
    %658 = vmatmul.bf16.gmra.mxu0 %v398
    %v659 = vpop.f32.mrf.mxu0
    %v660 = vadd.f32 %v571, %v659
    %v661 = vpop.f32.mrf.mxu0
    %v662 = vadd.f32 %v573, %v661
    %663 = vmatmul.bf16.gmra.mxu0 %v401
    %v664 = vpop.f32.mrf.mxu0
    %v665 = vadd.f32 %v576, %v664
    %v666 = vpop.f32.mrf.mxu0
    %v667 = vadd.f32 %v578, %v666
    %668 = vmatmul.bf16.gmra.mxu0 %v404
    %v669 = vpop.f32.mrf.mxu0
    %v670 = vadd.f32 %v581, %v669
    %v671 = vpop.f32.mrf.mxu0
    %v672 = vadd.f32 %v583, %v671
    %673 = vmatmul.bf16.gmra.mxu0 %v407
    %v674 = vpop.f32.mrf.mxu0
    %v675 = vadd.f32 %v586, %v674
    %v676 = vpop.f32.mrf.mxu0
    %v677 = vadd.f32 %v588, %v676
    %678 = vmatmul.bf16.gmra.mxu0 %v410
    %v679 = vpop.f32.mrf.mxu0
    %v680 = vadd.f32 %v591, %v679
    %v681 = vpop.f32.mrf.mxu0
    %v682 = vadd.f32 %v593, %v681
    %683 = vmatmul.bf16.gmra.mxu0 %v413
    %v684 = vpop.f32.mrf.mxu0
    %v685 = vadd.f32 %v596, %v684
    %v686 = vpop.f32.mrf.mxu0
    %v687 = vadd.f32 %v598, %v686
    %688 = vdwg.mxu0
    %v689 = vmax.f32 %v610, 0.0
    %v690 = vmax.f32 %v612, 0.0
    %v691 = vmax.f32 %v615, 0.0
    %v692 = vmax.f32 %v617, 0.0
    %v693 = vmax.f32 %v620, 0.0
    %v694 = vmax.f32 %v622, 0.0
    %v695 = vmax.f32 %v625, 0.0
    %v696 = vmax.f32 %v627, 0.0
    %v697 = vmax.f32 %v630, 0.0
    %v698 = vmax.f32 %v632, 0.0
    %v699 = vmax.f32 %v635, 0.0
    %v700 = vmax.f32 %v637, 0.0
    %v701 = vmax.f32 %v640, 0.0
    %v702 = vmax.f32 %v642, 0.0
    %v703 = vmax.f32 %v645, 0.0
    %v704 = vmax.f32 %v647, 0.0
    %v705 = vmax.f32 %v650, 0.0
    %v706 = vmax.f32 %v652, 0.0
    %v707 = vmax.f32 %v655, 0.0
    %v708 = vmax.f32 %v657, 0.0
    %v709 = vmax.f32 %v660, 0.0
    %v710 = vmax.f32 %v662, 0.0
    %v711 = vmax.f32 %v665, 0.0
    %v712 = vmax.f32 %v667, 0.0
    %v713 = vmax.f32 %v670, 0.0
    %v714 = vmax.f32 %v672, 0.0
    %v715 = vmax.f32 %v675, 0.0
    %v716 = vmax.f32 %v677, 0.0
    %v717 = vmax.f32 %v680, 0.0
    %v718 = vmax.f32 %v682, 0.0
    %v719 = vmax.f32 %v685, 0.0
    %v720 = vmax.f32 %v687, 0.0
    %v721 = vpack.c.bf16 %v690, %v689
    %v722 = vpack.c.bf16 %v692, %v691
    %v723 = vpack.c.bf16 %v694, %v693
    %v724 = vpack.c.bf16 %v696, %v695
    %v725 = vpack.c.bf16 %v698, %v697
    %v726 = vpack.c.bf16 %v700, %v699
    %v727 = vpack.c.bf16 %v702, %v701
    %v728 = vpack.c.bf16 %v704, %v703
    %v729 = vpack.c.bf16 %v706, %v705
    %v730 = vpack.c.bf16 %v708, %v707
    %v731 = vpack.c.bf16 %v710, %v709
    %v732 = vpack.c.bf16 %v712, %v711
    %v733 = vpack.c.bf16 %v714, %v713
    %v734 = vpack.c.bf16 %v716, %v715
    %v735 = vpack.c.bf16 %v718, %v717
    %v736 = vpack.c.bf16 %v720, %v719
    %v737 = vld [vmem:[%s3] sm:$0xf]
    %v738 = vld [vmem:[%s3 + $0x4] sm:$0xf]
    %v739 = vld [vmem:[%s3 + $0x8] sm:$0xf]
    %v740 = vld [vmem:[%s3 + $0xc] sm:$0xf]
    %v741 = vld [vmem:[%s3 + $0x10] sm:$0xf]
    %v742 = vld [vmem:[%s3 + $0x14] sm:$0xf]
    %v743 = vld [vmem:[%s3 + $0x18] sm:$0xf]
    %v744 = vld [vmem:[%s3 + $0x1c] sm:$0xf]
    %v745 = vld [vmem:[%s3 + $0x20] sm:$0xf]
    %v746 = vld [vmem:[%s3 + $0x24] sm:$0xf]
    %v747 = vld [vmem:[%s3 + $0x28] sm:$0xf]
    %v748 = vld [vmem:[%s3 + $0x2c] sm:$0xf]
    %v749 = vld [vmem:[%s3 + $0x30] sm:$0xf]
    %v750 = vld [vmem:[%s3 + $0x34] sm:$0xf]
    %v751 = vld [vmem:[%s3 + $0x38] sm:$0xf]
    %v752 = vld [vmem:[%s3 + $0x3c] sm:$0xf]
    %v753 = vld [vmem:[%s4] sm:$0x1]
    %v755 = vperm.slane %v753, 0
    %v773 = vunpack.c.l.b16 %v737
    %v774 = vunpack.c.l.b16 %v738
    %v775 = vunpack.c.l.b16 %v739
    %v776 = vunpack.c.l.b16 %v740
    %v777 = vunpack.c.l.b16 %v741
    %v778 = vunpack.c.l.b16 %v742
    %v779 = vunpack.c.l.b16 %v743
    %v780 = vunpack.c.l.b16 %v744
    %v781 = vunpack.c.l.b16 %v745
    %v782 = vunpack.c.l.b16 %v746
    %v783 = vunpack.c.l.b16 %v747
    %v784 = vunpack.c.l.b16 %v748
    %v785 = vunpack.c.l.b16 %v749
    %v786 = vunpack.c.l.b16 %v750
    %v787 = vunpack.c.l.b16 %v751
    %v788 = vunpack.c.l.b16 %v752
    %v789 = vpack.c.b16 %v774, %v773
    %v790 = vpack.c.b16 %v776, %v775
    %v791 = vpack.c.b16 %v778, %v777
    %v792 = vpack.c.b16 %v780, %v779
    %v793 = vpack.c.b16 %v782, %v781
    %v794 = vpack.c.b16 %v784, %v783
    %v795 = vpack.c.b16 %v786, %v785
    %v796 = vpack.c.b16 %v788, %v787
    %805 = vmatpush.bf16.msra.mxu0 %v796
    %806 = vmatpush.bf16.msra.mxu0 %v795
    %807 = vmatpush.bf16.msra.mxu0 %v794
    %808 = vmatpush.bf16.msra.mxu0 %v793
    %809 = vmatpush.bf16.msra.mxu0 %v792
    %810 = vmatpush.bf16.msra.mxu0 %v791
    %811 = vmatpush.bf16.msra.mxu0 %v790
    %812 = vmatpush.bf16.msra.mxu0 %v789
    %813 = vmatmul.bf16.gmra.mxu0 %v721
    %v814 = vpop.f32.mrf.mxu0
    %v815 = vadd.f32 %v755, %v814
    %v816 = vpop.f32.mrf.mxu0
    %v817 = vadd.f32 %v755, %v816
    %818 = vmatmul.bf16.gmra.mxu0 %v722
    %v819 = vpop.f32.mrf.mxu0
    %v820 = vadd.f32 %v755, %v819
    %v821 = vpop.f32.mrf.mxu0
    %v822 = vadd.f32 %v755, %v821
    %823 = vmatmul.bf16.gmra.mxu0 %v723
    %v824 = vpop.f32.mrf.mxu0
    %v825 = vadd.f32 %v755, %v824
    %v826 = vpop.f32.mrf.mxu0
    %v827 = vadd.f32 %v755, %v826
    %828 = vmatmul.bf16.gmra.mxu0 %v724
    %v829 = vpop.f32.mrf.mxu0
    %v830 = vadd.f32 %v755, %v829
    %v831 = vpop.f32.mrf.mxu0
    %v832 = vadd.f32 %v755, %v831
    %833 = vmatmul.bf16.gmra.mxu0 %v725
    %v834 = vpop.f32.mrf.mxu0
    %v835 = vadd.f32 %v755, %v834
    %v836 = vpop.f32.mrf.mxu0
    %v837 = vadd.f32 %v755, %v836
    %838 = vmatmul.bf16.gmra.mxu0 %v726
    %v839 = vpop.f32.mrf.mxu0
    %v840 = vadd.f32 %v755, %v839
    %v841 = vpop.f32.mrf.mxu0
    %v842 = vadd.f32 %v755, %v841
    %843 = vmatmul.bf16.gmra.mxu0 %v727
    %v844 = vpop.f32.mrf.mxu0
    %v845 = vadd.f32 %v755, %v844
    %v846 = vpop.f32.mrf.mxu0
    %v847 = vadd.f32 %v755, %v846
    %848 = vmatmul.bf16.gmra.mxu0 %v728
    %v849 = vpop.f32.mrf.mxu0
    %v850 = vadd.f32 %v755, %v849
    %v851 = vpop.f32.mrf.mxu0
    %v852 = vadd.f32 %v755, %v851
    %853 = vmatmul.bf16.gmra.mxu0 %v729
    %v854 = vpop.f32.mrf.mxu0
    %v855 = vadd.f32 %v755, %v854
    %v856 = vpop.f32.mrf.mxu0
    %v857 = vadd.f32 %v755, %v856
    %858 = vmatmul.bf16.gmra.mxu0 %v730
    %v859 = vpop.f32.mrf.mxu0
    %v860 = vadd.f32 %v755, %v859
    %v861 = vpop.f32.mrf.mxu0
    %v862 = vadd.f32 %v755, %v861
    %863 = vmatmul.bf16.gmra.mxu0 %v731
    %v864 = vpop.f32.mrf.mxu0
    %v865 = vadd.f32 %v755, %v864
    %v866 = vpop.f32.mrf.mxu0
    %v867 = vadd.f32 %v755, %v866
    %868 = vmatmul.bf16.gmra.mxu0 %v732
    %v869 = vpop.f32.mrf.mxu0
    %v870 = vadd.f32 %v755, %v869
    %v871 = vpop.f32.mrf.mxu0
    %v872 = vadd.f32 %v755, %v871
    %873 = vmatmul.bf16.gmra.mxu0 %v733
    %v874 = vpop.f32.mrf.mxu0
    %v875 = vadd.f32 %v755, %v874
    %v876 = vpop.f32.mrf.mxu0
    %v877 = vadd.f32 %v755, %v876
    %878 = vmatmul.bf16.gmra.mxu0 %v734
    %v879 = vpop.f32.mrf.mxu0
    %v880 = vadd.f32 %v755, %v879
    %v881 = vpop.f32.mrf.mxu0
    %v882 = vadd.f32 %v755, %v881
    %883 = vmatmul.bf16.gmra.mxu0 %v735
    %v884 = vpop.f32.mrf.mxu0
    %v885 = vadd.f32 %v755, %v884
    %v886 = vpop.f32.mrf.mxu0
    %v887 = vadd.f32 %v755, %v886
    %888 = vmatmul.bf16.gmra.mxu0 %v736
    %v889 = vpop.f32.mrf.mxu0
    %v890 = vadd.f32 %v755, %v889
    %v891 = vpop.f32.mrf.mxu0
    %v892 = vadd.f32 %v755, %v891
    %893 = vdwg.mxu0
    %v894 = vmax.f32 %v815, 0.0
    %v895 = vmax.f32 %v817, 0.0
    %v896 = vmax.f32 %v820, 0.0
    %v897 = vmax.f32 %v822, 0.0
    %v898 = vmax.f32 %v825, 0.0
    %v899 = vmax.f32 %v827, 0.0
    %v900 = vmax.f32 %v830, 0.0
    %v901 = vmax.f32 %v832, 0.0
    %v902 = vmax.f32 %v835, 0.0
    %v903 = vmax.f32 %v837, 0.0
    %v904 = vmax.f32 %v840, 0.0
    %v905 = vmax.f32 %v842, 0.0
    %v906 = vmax.f32 %v845, 0.0
    %v907 = vmax.f32 %v847, 0.0
    %v908 = vmax.f32 %v850, 0.0
    %v909 = vmax.f32 %v852, 0.0
    %v910 = vmax.f32 %v855, 0.0
    %v911 = vmax.f32 %v857, 0.0
    %v912 = vmax.f32 %v860, 0.0
    %v913 = vmax.f32 %v862, 0.0
    %v914 = vmax.f32 %v865, 0.0
    %v915 = vmax.f32 %v867, 0.0
    %v916 = vmax.f32 %v870, 0.0
    %v917 = vmax.f32 %v872, 0.0
    %v918 = vmax.f32 %v875, 0.0
    %v919 = vmax.f32 %v877, 0.0
    %v920 = vmax.f32 %v880, 0.0
    %v921 = vmax.f32 %v882, 0.0
    %v922 = vmax.f32 %v885, 0.0
    %v923 = vmax.f32 %v887, 0.0
    %v924 = vmax.f32 %v890, 0.0
    %v925 = vmax.f32 %v892, 0.0
    %v926 = vpack.c.bf16 %v895, %v894
    %v927 = vpack.c.bf16 %v897, %v896
    %v928 = vpack.c.bf16 %v899, %v898
    %v929 = vpack.c.bf16 %v901, %v900
    %v930 = vpack.c.bf16 %v903, %v902
    %v931 = vpack.c.bf16 %v905, %v904
    %v932 = vpack.c.bf16 %v907, %v906
    %v933 = vpack.c.bf16 %v909, %v908
    %v934 = vpack.c.bf16 %v911, %v910
    %v935 = vpack.c.bf16 %v913, %v912
    %v936 = vpack.c.bf16 %v915, %v914
    %v937 = vpack.c.bf16 %v917, %v916
    %v938 = vpack.c.bf16 %v919, %v918
    %v939 = vpack.c.bf16 %v921, %v920
    %v940 = vpack.c.bf16 %v923, %v922
    %v941 = vpack.c.bf16 %v925, %v924
    %v942 = vld [vmem:[%s5] sm:$0xf]
    %v943 = vld [vmem:[%s5 + $0x4] sm:$0xf]
    %v944 = vld [vmem:[%s5 + $0x8] sm:$0xf]
    %v945 = vld [vmem:[%s5 + $0xc] sm:$0xf]
    %v946 = vld [vmem:[%s6] sm:$0x1]
    %v948 = vperm.slane %v946, 0
    %v954 = vunpack.c.l.b16 %v942
    %v955 = vunpack.c.l.b16 %v943
    %v956 = vunpack.c.l.b16 %v944
    %v957 = vunpack.c.l.b16 %v945
    %v958 = vpack.c.b16 %v955, %v954
    %v959 = vpack.c.b16 %v957, %v956
    %vm962 = vcmask 261120
    %v964 = vsel %vm962, %v926, 0
    %v967 = vsel %vm962, %v927, 0
    %v970 = vsel %vm962, %v928, 0
    %v973 = vsel %vm962, %v929, 0
    %v976 = vsel %vm962, %v930, 0
    %v979 = vsel %vm962, %v931, 0
    %v982 = vsel %vm962, %v932, 0
    %v985 = vsel %vm962, %v933, 0
    %v988 = vsel %vm962, %v934, 0
    %v991 = vsel %vm962, %v935, 0
    %v994 = vsel %vm962, %v936, 0
    %v997 = vsel %vm962, %v937, 0
    %v1000 = vsel %vm962, %v938, 0
    %v1003 = vsel %vm962, %v939, 0
    %v1006 = vsel %vm962, %v940, 0
    %v1009 = vsel %vm962, %v941, 0
    %1011 = vmatpush.bf16.msra.mxu0 0
    %1012 = vmatpush.bf16.msra.mxu0 0
    %1013 = vmatpush.bf16.msra.mxu0 0
    %1014 = vmatpush.bf16.msra.mxu0 0
    %1015 = vmatpush.bf16.msra.mxu0 0
    %1016 = vmatpush.bf16.msra.mxu0 0
    %1017 = vmatpush.bf16.msra.mxu0 %v959
    %1018 = vmatpush.bf16.msra.mxu0 %v958
    %1019 = vmatmul.bf16.gmra.mxu0 %v964
    %v1020 = vpop.f32.mrf.mxu0
    %v1021 = vadd.f32 %v948, %v1020
    %v1022 = vpop.f32.mrf.mxu0
    %v1023 = vadd.f32 %v948, %v1022
    %1024 = vmatmul.bf16.gmra.mxu0 %v967
    %v1025 = vpop.f32.mrf.mxu0
    %v1026 = vadd.f32 %v948, %v1025
    %v1027 = vpop.f32.mrf.mxu0
    %v1028 = vadd.f32 %v948, %v1027
    %1029 = vmatmul.bf16.gmra.mxu0 %v970
    %v1030 = vpop.f32.mrf.mxu0
    %v1031 = vadd.f32 %v948, %v1030
    %v1032 = vpop.f32.mrf.mxu0
    %v1033 = vadd.f32 %v948, %v1032
    %1034 = vmatmul.bf16.gmra.mxu0 %v973
    %v1035 = vpop.f32.mrf.mxu0
    %v1036 = vadd.f32 %v948, %v1035
    %v1037 = vpop.f32.mrf.mxu0
    %v1038 = vadd.f32 %v948, %v1037
    %1039 = vmatmul.bf16.gmra.mxu0 %v976
    %v1040 = vpop.f32.mrf.mxu0
    %v1041 = vadd.f32 %v948, %v1040
    %v1042 = vpop.f32.mrf.mxu0
    %v1043 = vadd.f32 %v948, %v1042
    %1044 = vmatmul.bf16.gmra.mxu0 %v979
    %v1045 = vpop.f32.mrf.mxu0
    %v1046 = vadd.f32 %v948, %v1045
    %v1047 = vpop.f32.mrf.mxu0
    %v1048 = vadd.f32 %v948, %v1047
    %1049 = vmatmul.bf16.gmra.mxu0 %v982
    %v1050 = vpop.f32.mrf.mxu0
    %v1051 = vadd.f32 %v948, %v1050
    %v1052 = vpop.f32.mrf.mxu0
    %v1053 = vadd.f32 %v948, %v1052
    %1054 = vmatmul.bf16.gmra.mxu0 %v985
    %v1055 = vpop.f32.mrf.mxu0
    %v1056 = vadd.f32 %v948, %v1055
    %v1057 = vpop.f32.mrf.mxu0
    %v1058 = vadd.f32 %v948, %v1057
    %1059 = vmatmul.bf16.gmra.mxu0 %v988
    %v1060 = vpop.f32.mrf.mxu0
    %v1061 = vadd.f32 %v948, %v1060
    %v1062 = vpop.f32.mrf.mxu0
    %v1063 = vadd.f32 %v948, %v1062
    %1064 = vmatmul.bf16.gmra.mxu0 %v991
    %v1065 = vpop.f32.mrf.mxu0
    %v1066 = vadd.f32 %v948, %v1065
    %v1067 = vpop.f32.mrf.mxu0
    %v1068 = vadd.f32 %v948, %v1067
    %1069 = vmatmul.bf16.gmra.mxu0 %v994
    %v1070 = vpop.f32.mrf.mxu0
    %v1071 = vadd.f32 %v948, %v1070
    %v1072 = vpop.f32.mrf.mxu0
    %v1073 = vadd.f32 %v948, %v1072
    %1074 = vmatmul.bf16.gmra.mxu0 %v997
    %v1075 = vpop.f32.mrf.mxu0
    %v1076 = vadd.f32 %v948, %v1075
    %v1077 = vpop.f32.mrf.mxu0
    %v1078 = vadd.f32 %v948, %v1077
    %1079 = vmatmul.bf16.gmra.mxu0 %v1000
    %v1080 = vpop.f32.mrf.mxu0
    %v1081 = vadd.f32 %v948, %v1080
    %v1082 = vpop.f32.mrf.mxu0
    %v1083 = vadd.f32 %v948, %v1082
    %1084 = vmatmul.bf16.gmra.mxu0 %v1003
    %v1085 = vpop.f32.mrf.mxu0
    %v1086 = vadd.f32 %v948, %v1085
    %v1087 = vpop.f32.mrf.mxu0
    %v1088 = vadd.f32 %v948, %v1087
    %1089 = vmatmul.bf16.gmra.mxu0 %v1006
    %v1090 = vpop.f32.mrf.mxu0
    %v1091 = vadd.f32 %v948, %v1090
    %v1092 = vpop.f32.mrf.mxu0
    %v1093 = vadd.f32 %v948, %v1092
    %1094 = vmatmul.bf16.gmra.mxu0 %v1009
    %v1095 = vpop.f32.mrf.mxu0
    %v1096 = vadd.f32 %v948, %v1095
    %v1097 = vpop.f32.mrf.mxu0
    %v1098 = vadd.f32 %v948, %v1097
    %1099 = vdwg.mxu0
    %v1100 = vmax.f32 %v1021, 0.0
    %v1101 = vmax.f32 %v1023, 0.0
    %v1102 = vmax.f32 %v1026, 0.0
    %v1103 = vmax.f32 %v1028, 0.0
    %v1104 = vmax.f32 %v1031, 0.0
    %v1105 = vmax.f32 %v1033, 0.0
    %v1106 = vmax.f32 %v1036, 0.0
    %v1107 = vmax.f32 %v1038, 0.0
    %v1108 = vmax.f32 %v1041, 0.0
    %v1109 = vmax.f32 %v1043, 0.0
    %v1110 = vmax.f32 %v1046, 0.0
    %v1111 = vmax.f32 %v1048, 0.0
    %v1112 = vmax.f32 %v1051, 0.0
    %v1113 = vmax.f32 %v1053, 0.0
    %v1114 = vmax.f32 %v1056, 0.0
    %v1115 = vmax.f32 %v1058, 0.0
    %v1116 = vmax.f32 %v1061, 0.0
    %v1117 = vmax.f32 %v1063, 0.0
    %v1118 = vmax.f32 %v1066, 0.0
    %v1119 = vmax.f32 %v1068, 0.0
    %v1120 = vmax.f32 %v1071, 0.0
    %v1121 = vmax.f32 %v1073, 0.0
    %v1122 = vmax.f32 %v1076, 0.0
    %v1123 = vmax.f32 %v1078, 0.0
    %v1124 = vmax.f32 %v1081, 0.0
    %v1125 = vmax.f32 %v1083, 0.0
    %v1126 = vmax.f32 %v1086, 0.0
    %v1127 = vmax.f32 %v1088, 0.0
    %v1128 = vmax.f32 %v1091, 0.0
    %v1129 = vmax.f32 %v1093, 0.0
    %v1130 = vmax.f32 %v1096, 0.0
    %v1131 = vmax.f32 %v1098, 0.0
    %v1132 = vld [vmem:[%s7] sm:$0xff]
    %vm1133 = vcmask 130048
    %v1135 = vsel %vm1133, %v1132, 0
    %v1138 = vsel %vm1133, %v1100, 0
    %v1141 = vsel %vm1133, %v1101, 0
    %v1144 = vsel %vm1133, %v1102, 0
    %v1147 = vsel %vm1133, %v1103, 0
    %v1150 = vsel %vm1133, %v1104, 0
    %v1153 = vsel %vm1133, %v1105, 0
    %v1156 = vsel %vm1133, %v1106, 0
    %v1159 = vsel %vm1133, %v1107, 0
    %v1162 = vsel %vm1133, %v1108, 0
    %v1165 = vsel %vm1133, %v1109, 0
    %v1168 = vsel %vm1133, %v1110, 0
    %v1171 = vsel %vm1133, %v1111, 0
    %v1174 = vsel %vm1133, %v1112, 0
    %v1177 = vsel %vm1133, %v1113, 0
    %v1180 = vsel %vm1133, %v1114, 0
    %v1183 = vsel %vm1133, %v1115, 0
    %v1186 = vsel %vm1133, %v1116, 0
    %v1189 = vsel %vm1133, %v1117, 0
    %v1192 = vsel %vm1133, %v1118, 0
    %v1195 = vsel %vm1133, %v1119, 0
    %v1198 = vsel %vm1133, %v1120, 0
    %v1201 = vsel %vm1133, %v1121, 0
    %v1204 = vsel %vm1133, %v1122, 0
    %v1207 = vsel %vm1133, %v1123, 0
    %v1210 = vsel %vm1133, %v1124, 0
    %v1213 = vsel %vm1133, %v1125, 0
    %v1216 = vsel %vm1133, %v1126, 0
    %v1219 = vsel %vm1133, %v1127, 0
    %v1222 = vsel %vm1133, %v1128, 0
    %v1225 = vsel %vm1133, %v1129, 0
    %v1228 = vsel %vm1133, %v1130, 0
    %v1231 = vsel %vm1133, %v1131, 0
    %1233 = vmatpush.xpose.msra.mxu0 %v1183
    %1234 = vmatpush.xpose.msra.mxu0 %v1180
    %1235 = vmatpush.xpose.msra.mxu0 %v1177
    %1236 = vmatpush.xpose.msra.mxu0 %v1174
    %1237 = vmatpush.xpose.msra.mxu0 %v1171
    %1238 = vmatpush.xpose.msra.mxu0 %v1168
    %1239 = vmatpush.xpose.msra.mxu0 %v1165
    %1240 = vmatpush.xpose.msra.mxu0 %v1162
    %1241 = vmatpush.xpose.msra.mxu0 %v1159
    %1242 = vmatpush.xpose.msra.mxu0 %v1156
    %1243 = vmatpush.xpose.msra.mxu0 %v1153
    %1244 = vmatpush.xpose.msra.mxu0 %v1150
    %1245 = vmatpush.xpose.msra.mxu0 %v1147
    %1246 = vmatpush.xpose.msra.mxu0 %v1144
    %1247 = vmatpush.xpose.msra.mxu0 %v1141
    %1248 = vmatpush.xpose.msra.mxu0 %v1138
    %1249 = vmatmul.f32.gmra.mxu0 %v1135
    %v1250 = vpop.f32.mrf.mxu0
    %v1251 = vadd.f32 0.0, %v1250
    %1252 = vdwg.mxu0
    %1253 = vmatpush.xpose.msra.mxu0 %v1231
    %1254 = vmatpush.xpose.msra.mxu0 %v1228
    %1255 = vmatpush.xpose.msra.mxu0 %v1225
    %1256 = vmatpush.xpose.msra.mxu0 %v1222
    %1257 = vmatpush.xpose.msra.mxu0 %v1219
    %1258 = vmatpush.xpose.msra.mxu0 %v1216
    %1259 = vmatpush.xpose.msra.mxu0 %v1213
    %1260 = vmatpush.xpose.msra.mxu0 %v1210
    %1261 = vmatpush.xpose.msra.mxu0 %v1207
    %1262 = vmatpush.xpose.msra.mxu0 %v1204
    %1263 = vmatpush.xpose.msra.mxu0 %v1201
    %1264 = vmatpush.xpose.msra.mxu0 %v1198
    %1265 = vmatpush.xpose.msra.mxu0 %v1195
    %1266 = vmatpush.xpose.msra.mxu0 %v1192
    %1267 = vmatpush.xpose.msra.mxu0 %v1189
    %1268 = vmatpush.xpose.msra.mxu0 %v1186
    %1269 = vmatmul.f32.gmra.mxu0 %v1135
    %v1270 = vpop.f32.mrf.mxu0
    %v1271 = vadd.f32 0.0, %v1270
    %1272 = vdwg.mxu0
    %s1273 = sld [smem:[#allocation2]]
    %v1274 = vstv %s1273
    %v1275 = vadd.f32 %v1251, %v1274
    %v1276 = vadd.f32 %v1271, %v1274
    %v1277 = vand.u32 2147483647, %v1275
    %v1278 = vand.u32 2147483647, %v1276
    %v1279 = vsub.f32 0.0, %v1277
    %v1280 = vsub.f32 0.0, %v1278
    %v1281 = vmul.f32 %v1279, 1.442695
    %v1282 = vpow.pop %v1281
    %v1283 = vmul.f32 %v1280, 1.442695
    %v1284 = vpow.pop %v1283
    %vm1285 = vcmp.ge.f32.partialorder %v1275, 0.0
    %vm1286 = vcmp.ge.f32.partialorder %v1276, 0.0
    %v1287 = vadd.f32 %v1282, 1.0
    %v1288 = vadd.f32 %v1284, 1.0
    %v1289 = vrcp.pop %v1287
    %v1290 = vmul.f32 %v1287, %v1289
    %v1291 = vsub.f32 1.0, %v1290
    %v1292 = vmul.f32 %v1289, %v1291
    %v1293 = vadd.f32 %v1289, %v1292
    %vm1294 = vweird.f32 %v1287
    %vm1295 = vweird.f32 %v1289
    %vm1296 = vmor %vm1294, %vm1295
    %v1297 = vsel %vm1296, %v1289, %v1293
    %v1298 = vand.u32 2147483647, %v1287
    %vm1299 = vcmp.eq.f32.partialorder %v1298, 8.507059e+37
    %v1300 = vand.u32 %v1287, 2147483648
    %v1301 = vor.u32 1.1754944e-38, %v1300
    %v1302 = vsel %vm1299, %v1301, %v1297
    %v1303 = vmul.f32 1.0, %v1302
    %v1304 = vrcp.pop %v1288
    %v1305 = vmul.f32 %v1288, %v1304
    %v1306 = vsub.f32 1.0, %v1305
    %v1307 = vmul.f32 %v1304, %v1306
    %v1308 = vadd.f32 %v1304, %v1307
    %vm1309 = vweird.f32 %v1288
    %vm1310 = vweird.f32 %v1304
    %vm1311 = vmor %vm1309, %vm1310
    %v1312 = vsel %vm1311, %v1304, %v1308
    %v1313 = vand.u32 2147483647, %v1288
    %vm1314 = vcmp.eq.f32.partialorder %v1313, 8.507059e+37
    %v1315 = vand.u32 %v1288, 2147483648
    %v1316 = vor.u32 1.1754944e-38, %v1315
    %v1317 = vsel %vm1314, %v1316, %v1312
    %v1318 = vmul.f32 1.0, %v1317
    %v1319 = vmul.f32 %v1282, %v1302
    %v1320 = vmul.f32 %v1284, %v1317
    %v1321 = vsel %vm1285, %v1303, %v1319
    %v1322 = vsel %vm1286, %v1318, %v1320
    %v1325 = vrot.slane %v1322, 7
    %vm1326 = vcmask 1040384
    %v1327 = vsel %vm1326, %v1321, %v1325
    %v1329 = vlaneseq
    %vm1330 = vcmp.ge.s32.totalorder %v1329, 0
    %vm1331 = vcmp.lt.s32.totalorder %v1329, 256
    %vm1332 = vmand %vm1330, %vm1331
    %1333 = vst.msk [vmem:[#allocation3] sm:$0x3] %vm1332, %v1327
    // Predicated region
    $region38: #{tpu_custom_call.1} parent=1 // pred_check
      _
    $region39: #{tpu_custom_call.1} parent=1 // pred_check_branch
      %1335 = sbr.rel (0) target = $region41
    $region40: #{tpu_custom_call.1} parent=1 // pred_region
      %1337 = vsyncadd [#allocation4], 0
      %s1339 = sshll.u32 [#allocation3], 4
      %s1340 = int_to_ptr.vmem [resolvable:$true] %s1339
      %s1341 = sshll.u32 %s9, 4
      %s1342 = int_to_ptr.hbm [resolvable:$true] %s1341
      %1344 = dma.vmem_to_hbm [thread:$0]  %s1340, 32, %s1342, [#allocation4]
    $region41: #{tpu_custom_call.1} parent=1 // pred_fallthru
      _
    // Predicated region
    $region42: #{tpu_custom_call.1} parent=1 // pred_check
      _
    $region43: #{tpu_custom_call.1} parent=1 // pred_check_branch
      %1346 = sbr.rel (0) target = $region45
    $region44: #{tpu_custom_call.1} parent=1 // pred_region
      %1348 = dma.done [#allocation4], 32
    $region45: #{tpu_custom_call.1} parent=1 // pred_fallthru
      _
    %1349 = vsyncpa [#allocation4], 1

</llo_original>
